<compile_context>
chip_gen: v7x
topology: tpu7x:2x2x1
jax: 0.10.0
libtpu: 0.0.40
codegen_flags: <defaults>
</compile_context>

<pallas_src>
import functools

import jax
import jax.numpy as jnp
from jax.experimental import pallas as pl
from jax.experimental.pallas import tpu as pltpu

_SUB = 8  # sublanes per vreg; packed row-axis "height"


def _yolo_loss_kernel(inv_anc_ref, pred_ref, tgt_ref, out_ref, *,
                      rows_per_anchor, cols_per_anchor, unroll_classes):
    """Partial-sum kernel (one anchor, one packed row tile per grid step).

    inv_anc_ref : SMEM (2*A,) f32     [1/w0, 1/h0, 1/w1, 1/h1, ...]
    pred_ref    : VMEM (1, D, 8, TC)  one anchor's predictions (rows packed
                                      8-deep on sublanes, TC columns on lanes)
    tgt_ref     : VMEM (1, 6, 8, TC)
    out_ref     : VMEM (8, 8, TC)     dense per-(sublane, lane) partial sums:
                                      [bce, noobj, soft, box, ce,
                                       obj_cnt, noobj_cnt, soft_cnt]
    """
    c = pl.program_id(0)            # core-split index ("parallel")
    a = pl.program_id(1)            # anchor index
    i = pl.program_id(2)            # column-tile index within this core

    @pl.when(jnp.logical_and(a == 0, i == 0))
    def _init():
        out_ref[...] = jnp.zeros(out_ref.shape, jnp.float32)

    tc = pred_ref.shape[3]

    # Validity mask from the *logical* (unclamped) block index: kills both the
    # zero-padded tail rows and any clamped/duplicated tiles of the core split.
    # NOTE: keep where-select masking (not multiply-by-mask).
    blk = c * pl.num_programs(2) + i
    lane = jax.lax.broadcasted_iota(jnp.int32, (_SUB, tc), 1)
    sub = jax.lax.broadcasted_iota(jnp.int32, (_SUB, tc), 0)
    col = blk * tc + lane
    flat_row = sub * cols_per_anchor + col
    valid = jnp.logical_and(col < cols_per_anchor, flat_row < rows_per_anchor)

    t0 = tgt_ref[0, 0].astype(jnp.float32)          # (8, TC)
    p0 = pred_ref[0, 0].astype(jnp.float32)

    obj = jnp.logical_and(t0 == 1.0, valid)
    noobj = jnp.logical_and(t0 == 0.0, valid)
    soft = jnp.logical_and(jnp.logical_and(t0 > 0.0, t0 < 1.0), valid)

    # --- objectness BCE-with-logits (obj cells only) -------------------------
    bce = jnp.maximum(p0, 0.0) - p0 * t0 + jnp.log1p(jnp.exp(-jnp.abs(p0)))
    out_ref[0] += jnp.where(obj, bce, 0.0)

    # --- no-object / soft no-object: -(1-t) * log(1 - sigmoid(p) + 1e-6) -----
    neg = -(1.0 - t0) * jnp.log(1.0 - jax.nn.sigmoid(p0) + 1e-6)
    out_ref[1] += jnp.where(noobj, neg, 0.0)
    out_ref[2] += jnp.where(soft, neg, 0.0)

    # --- box MSE (obj cells only); anchors as scalar reciprocals -------------
    inv_aw = inv_anc_ref[2 * a]
    inv_ah = inv_anc_ref[2 * a + 1]
    dx = (jax.nn.sigmoid(pred_ref[0, 1].astype(jnp.float32))
          - tgt_ref[0, 1].astype(jnp.float32))
    dy = (jax.nn.sigmoid(pred_ref[0, 2].astype(jnp.float32))
          - tgt_ref[0, 2].astype(jnp.float32))
    dw = pred_ref[0, 3].astype(jnp.float32) - jnp.log(
        1e-6 + tgt_ref[0, 3].astype(jnp.float32) * inv_aw)
    dh = pred_ref[0, 4].astype(jnp.float32) - jnp.log(
        1e-6 + tgt_ref[0, 4].astype(jnp.float32) * inv_ah)
    sq = dx * dx + dy * dy + dw * dw + dh * dh
    out_ref[3] += jnp.where(obj, sq, 0.0)

    # --- class cross-entropy (obj cells only), streamed over channels --------
    num_cls = pred_ref.shape[1] - 5
    cls_idx = tgt_ref[0, 5].astype(jnp.int32)       # (8, TC)

    m0 = pred_ref[0, 5].astype(jnp.float32)         # channel-0 logit
    s0 = jnp.ones_like(m0)
    picked0 = jnp.where(cls_idx == 0, m0, 0.0)

    def body(k, carry):
        m, s, picked = carry
        x = pred_ref[0, 5 + k].astype(jnp.float32)
        m_new = jnp.maximum(m, x)
        s = s * jnp.exp(m - m_new) + jnp.exp(x - m_new)
        picked = picked + jnp.where(cls_idx == k, x, 0.0)
        return m_new, s, picked

    m, s, picked = jax.lax.fori_loop(1, num_cls, body, (m0, s0, picked0),
                                     unroll=unroll_classes)
    ce = (m + jnp.log(s)) - picked
    out_ref[4] += jnp.where(obj, ce, 0.0)

    out_ref[5] += obj.astype(jnp.float32)
    out_ref[6] += noobj.astype(jnp.float32)
    out_ref[7] += soft.astype(jnp.float32)


def _default_num_cores():
    """Best-effort TensorCore count (1 on single-TC v5e/v6e, 2 where reported)."""
    try:
        info = pltpu.get_tpu_info()
        for name in ("num_cores", "num_tensorcores", "tensor_core_count",
                     "core_count"):
            v = getattr(info, name, None)
            if v:
                return max(1, min(2, int(v)))
    except Exception:
        pass
    return 1


def yolo_loss_pallas(predictions, target, anchors, *, tile_rows=32768,
                     num_cores=None):
    B, A, S1, S2, D = predictions.shape
    assert target.shape[-1] == 6 and D >= 6
    Na = B * S1 * S2                         # rows (cells) per anchor

    if num_cores is None:
        num_cores = _default_num_cores()

    # One XLA copy pass: channel-major, anchor-leading, row axis flattened.
    # The pad + reshape below fuse into the same pass; the dtype cast happens
    # in-kernel after the DMA, so the original dtype travels over HBM.
    pred_t = jnp.transpose(predictions, (1, 4, 0, 2, 3)).reshape(A, D, Na)
    tgt_t = jnp.transpose(target, (1, 4, 0, 2, 3)).reshape(A, 6, Na)
    # TODO(synk): producing the (A, D, 8, NC) layout upstream in the model
    # would remove this extra HBM read+write of both tensors.

    # Pack rows 8-deep on sublanes: (A, ch, Na) -> (A, ch, 8, nc_pad).
    nc_cols = -(-Na // _SUB)                               # lanes needed
    tile_c_req = max(128, (max(int(tile_rows), _SUB) // _SUB // 128) * 128)
    if nc_cols <= tile_c_req:
        tile_c, nb = nc_cols, 1
    else:
        tile_c = tile_c_req
        nb = -(-nc_cols // tile_c)
    nc_pad = nb * tile_c
    pad_rows = _SUB * nc_pad - Na
    if pad_rows:
        pred_t = jnp.pad(pred_t, ((0, 0), (0, 0), (0, pad_rows)))
        tgt_t = jnp.pad(tgt_t, ((0, 0), (0, 0), (0, pad_rows)))
    pred_p = pred_t.reshape(A, D, _SUB, nc_pad)
    tgt_p = tgt_t.reshape(A, 6, _SUB, nc_pad)

    # Tiny SMEM table of anchor reciprocals: [1/w0, 1/h0, 1/w1, 1/h1, ...].
    inv_anc = (1.0 / anchors.astype(jnp.float32)).reshape(-1)

    ncores = max(1, min(int(num_cores), nb))
    inner = -(-nb // ncores)                 # column tiles per core (ceil)
    last = nb - 1

    def in_map(c, a_, i):
        # Clamp so no DMA starts past the array; duplicated tiles are zeroed
        # in-kernel via the logical (unclamped) column index.
        return (a_, 0, 0, jnp.minimum(c * inner + i, last))

    kernel = functools.partial(
        _yolo_loss_kernel, rows_per_anchor=Na, cols_per_anchor=nc_pad,
        unroll_classes=bool(D - 5 <= 9))

    acc = pl.pallas_call(
        kernel,
        out_shape=jax.ShapeDtypeStruct((ncores * 8, _SUB, tile_c), jnp.float32),
        grid_spec=pltpu.PrefetchScalarGridSpec(
            num_scalar_prefetch=0,
            grid=(ncores, A, inner),
            in_specs=[
                pl.BlockSpec(memory_space=pltpu.MemorySpace.SMEM),
                pl.BlockSpec((1, D, _SUB, tile_c), in_map),
                pl.BlockSpec((1, 6, _SUB, tile_c), in_map),
            ],
            out_specs=pl.BlockSpec((8, _SUB, tile_c),
                                   lambda c, a_, i: (c, 0, 0)),
        ),
        compiler_params=pltpu.CompilerParams(
            dimension_semantics=("parallel", "arbitrary", "arbitrary"),
            vmem_limit_bytes=48 * 1024 * 1024),
    )(inv_anc, pred_p, tgt_p)

    # Single deferred cross-lane/sublane reduction (tiny).
    sums = acc.reshape(ncores, 8, _SUB * tile_c).sum(axis=(0, 2))
    bce_sum, noobj_sum, soft_sum, box_sum, ce_sum = (
        sums[0], sums[1], sums[2], sums[3], sums[4])
    obj_cnt, noobj_cnt, soft_cnt = sums[5], sums[6], sums[7]

    lambda_class, lambda_noobj, lambda_obj, lambda_box = 1.0, 10.0, 1.0, 10.0

    object_loss = bce_sum / obj_cnt
    no_object_loss = lambda_noobj * (noobj_sum / noobj_cnt + soft_sum / soft_cnt)
    box_loss = box_sum / (4.0 * obj_cnt)
    class_loss = ce_sum / obj_cnt

    return (lambda_box * box_loss,
            lambda_obj * object_loss,
            no_object_loss,
            lambda_class * class_loss)


def yolo_loss_ref(predictions, target, anchors):
    """Pure-JAX reference reproducing the PyTorch forward semantics."""
    A = predictions.shape[1]
    t0 = target[..., 0]
    obj = t0 == 1.0
    noobj = t0 == 0.0
    soft = (t0 > 0.0) & (t0 < 1.0)
    anc = anchors.reshape(1, A, 1, 1, 2)

    p0 = predictions[..., 0]
    bce = jnp.maximum(p0, 0.0) - p0 * t0 + jnp.log1p(jnp.exp(-jnp.abs(p0)))
    object_loss = jnp.sum(jnp.where(obj, bce, 0.0)) / jnp.sum(obj)

    neg = -(1.0 - t0) * jnp.log(1.0 - jax.nn.sigmoid(p0) + 1e-6)
    noobj_mean = jnp.sum(jnp.where(noobj, neg, 0.0)) / jnp.sum(noobj)
    soft_mean = jnp.sum(jnp.where(soft, neg, 0.0)) / jnp.sum(soft)
    no_object_loss = 10.0 * (noobj_mean + soft_mean)

    pxy = jax.nn.sigmoid(predictions[..., 1:3])
    pwh = predictions[..., 3:5]
    txy = target[..., 1:3]
    twh = jnp.log(1e-6 + target[..., 3:5] / anc)
    sq = jnp.sum((pxy - txy) ** 2, -1) + jnp.sum((pwh - twh) ** 2, -1)
    box_loss = jnp.sum(jnp.where(obj, sq, 0.0)) / (4.0 * jnp.sum(obj))

    logits = predictions[..., 5:]
    lse = jax.scipy.special.logsumexp(logits, axis=-1)
    cls = target[..., 5].astype(jnp.int32)
    picked = jnp.take_along_axis(logits, cls[..., None], axis=-1)[..., 0]
    ce = lse - picked
    class_loss = jnp.sum(jnp.where(obj, ce, 0.0)) / jnp.sum(obj)

    return 10.0 * box_loss, 1.0 * object_loss, no_object_loss, 1.0 * class_loss


def _make_inputs(key, B, A, S, C):
    D = 5 + C
    k1, k2, k3, k4, k5, k6, k7 = jax.random.split(key, 7)
    predictions = jax.random.normal(k1, (B, A, S, S, D), dtype=jnp.float32)
    # objectness: ~20% exact 1.0, ~60% exact 0.0, rest a fraction in (0, 1)
    u = jax.random.uniform(k2, (B, A, S, S))
    frac = jax.random.uniform(k3, (B, A, S, S), minval=0.1, maxval=0.9)
    t0 = jnp.where(u < 0.2, 1.0, jnp.where(u < 0.8, 0.0, frac)).astype(jnp.float32)
    txy = jax.random.uniform(k4, (B, A, S, S, 2), minval=0.0, maxval=1.0)
    twh = jax.random.uniform(k5, (B, A, S, S, 2), minval=0.1, maxval=2.0)
    tcls = jax.random.randint(k6, (B, A, S, S, 1), 0, C).astype(jnp.float32)
    target = jnp.concatenate([t0[..., None], txy, twh, tcls], axis=-1)
    anchors = jax.random.uniform(k7, (A, 2), minval=0.2, maxval=1.5)
    return predictions, target, anchors


if __name__ == "__main__":
    key = jax.random.PRNGKey(0)
    k_a, k_b = jax.random.split(key)

    # Case 1: small canonical shape, single column tile, default core count.
    p1, t1, a1 = _make_inputs(k_a, B=2, A=3, S=8, C=4)
    out1 = jax.block_until_ready(yolo_loss_pallas(p1, t1, a1))
    ref1 = yolo_loss_ref(p1, t1, a1)
    for got, want in zip(out1, ref1):
        assert jnp.allclose(got, want, rtol=2e-4, atol=1e-4), (got, want)

    # Case 2: exercises row padding, multiple column tiles, the 2-way core
    # split and the clamped duplicate-tile masking path.
    p2, t2, a2 = _make_inputs(k_b, B=2, A=3, S=36, C=4)
    out2 = jax.block_until_ready(
        yolo_loss_pallas(p2, t2, a2, tile_rows=1024, num_cores=2))
    ref2 = yolo_loss_ref(p2, t2, a2)
    for got, want in zip(out2, ref2):
        assert jnp.allclose(got, want, rtol=2e-4, atol=1e-4), (got, want)

    print("KERNEL_OK")
</pallas_src>

<mosaic_0001>
module attributes {stable_mosaic.version = 11 : i64} {
  func.func @_yolo_loss_kernel(%arg0: i32, %arg1: i32, %arg2: i32, %arg3: memref<6xf32, #tpu.memory_space<smem>>, %arg4: memref<1x9x8x16xf32, #tpu.memory_space<vmem>>, %arg5: memref<1x6x8x16xf32, #tpu.memory_space<vmem>>, %arg6: memref<8x8x16xf32, #tpu.memory_space<vmem>>) attributes {dimension_semantics = [#tpu.dimension_semantics<parallel>, #tpu.dimension_semantics<arbitrary>, #tpu.dimension_semantics<arbitrary>], iteration_bounds = array<i64: 1, 3, 1>, scalar_prefetch = 0 : i64, scratch_operands = 0 : i64, tpu.core_type = #tpu.core_type<tc>, window_params = [{transform_indices = @transform_0, window_bounds = array<i64: 6>}, {transform_indices = @transform_1, window_bounds = array<i64: 1, 9, 8, 16>}, {transform_indices = @transform_2, window_bounds = array<i64: 1, 6, 8, 16>}, {transform_indices = @transform_3, window_bounds = array<i64: 8, 8, 16>}]} {
    %c0_i32 = arith.constant 0 : i32
    %0 = arith.cmpi eq, %arg1, %c0_i32 : i32
    %c0_i32_0 = arith.constant 0 : i32
    %1 = arith.cmpi eq, %arg2, %c0_i32_0 : i32
    %2 = arith.andi %0, %1 : i1
    %3 = arith.extui %2 : i1 to i32
    %c0_i32_1 = arith.constant 0 : i32
    %4 = arith.cmpi ne, %3, %c0_i32_1 : i32
    scf.if %4 {
      %cst_133 = arith.constant 0.000000e+00 : f32
      %240 = vector.broadcast %cst_133 : f32 to vector<8x8x16xf32>
      %c0_134 = arith.constant 0 : index
      %c0_135 = arith.constant 0 : index
      %c0_136 = arith.constant 0 : index
      %241 = vector.load %arg6[%c0_134, %c0_135, %c0_136] : memref<8x8x16xf32, #tpu.memory_space<vmem>>, vector<8x8x16xf32>
      tpu.vector_store %arg6[%c0_134, %c0_135, %c0_136], %240 {strides = array<i32>} : memref<8x8x16xf32, #tpu.memory_space<vmem>>, vector<8x8x16xf32>,
    } else {
    }
    %c1_i32 = arith.constant 1 : i32
    %5 = arith.muli %arg0, %c1_i32 : i32
    %6 = arith.addi %5, %arg2 : i32
    %7 = tpu.iota {dimensions = array<i32: 1>} : vector<8x16xi32>
    %8 = tpu.iota {dimensions = array<i32: 0>} : vector<8x16xi32>
    %c16_i32 = arith.constant 16 : i32
    %9 = arith.muli %6, %c16_i32 : i32
    %10 = vector.broadcast %9 : i32 to vector<8x16xi32>
    %11 = arith.addi %10, %7 : vector<8x16xi32>
    %c16_i32_2 = arith.constant 16 : i32
    %12 = vector.broadcast %c16_i32_2 : i32 to vector<8x16xi32>
    %13 = arith.muli %8, %12 : vector<8x16xi32>
    %14 = arith.addi %13, %11 : vector<8x16xi32>
    %c16_i32_3 = arith.constant 16 : i32
    %15 = vector.broadcast %c16_i32_3 : i32 to vector<8x16xi32>
    %16 = arith.cmpi slt, %11, %15 : vector<8x16xi32>
    %c128_i32 = arith.constant 128 : i32
    %17 = vector.broadcast %c128_i32 : i32 to vector<8x16xi32>
    %18 = arith.cmpi slt, %14, %17 : vector<8x16xi32>
    %19 = arith.andi %16, %18 : vector<8x16xi1>
    %c0 = arith.constant 0 : index
    %c0_4 = arith.constant 0 : index
    %c0_5 = arith.constant 0 : index
    %c0_6 = arith.constant 0 : index
    %20 = vector.load %arg5[%c0, %c0_4, %c0_5, %c0_6] : memref<1x6x8x16xf32, #tpu.memory_space<vmem>>, vector<1x1x8x16xf32>
    %21 = vector.shape_cast %20 : vector<1x1x8x16xf32> to vector<8x16xf32>
    %c0_7 = arith.constant 0 : index
    %c0_8 = arith.constant 0 : index
    %c0_9 = arith.constant 0 : index
    %c0_10 = arith.constant 0 : index
    %22 = vector.load %arg4[%c0_7, %c0_8, %c0_9, %c0_10] : memref<1x9x8x16xf32, #tpu.memory_space<vmem>>, vector<1x1x8x16xf32>
    %23 = vector.shape_cast %22 : vector<1x1x8x16xf32> to vector<8x16xf32>
    %cst = arith.constant 1.000000e+00 : f32
    %24 = vector.broadcast %cst : f32 to vector<8x16xf32>
    %25 = arith.cmpf oeq, %21, %24 : vector<8x16xf32>
    %26 = arith.andi %25, %19 : vector<8x16xi1>
    %cst_11 = arith.constant 0.000000e+00 : f32
    %27 = vector.broadcast %cst_11 : f32 to vector<8x16xf32>
    %28 = arith.cmpf oeq, %21, %27 : vector<8x16xf32>
    %29 = arith.andi %28, %19 : vector<8x16xi1>
    %cst_12 = arith.constant 0.000000e+00 : f32
    %30 = vector.broadcast %cst_12 : f32 to vector<8x16xf32>
    %31 = arith.cmpf ogt, %21, %30 : vector<8x16xf32>
    %cst_13 = arith.constant 1.000000e+00 : f32
    %32 = vector.broadcast %cst_13 : f32 to vector<8x16xf32>
    %33 = arith.cmpf olt, %21, %32 : vector<8x16xf32>
    %34 = arith.andi %31, %33 : vector<8x16xi1>
    %35 = arith.andi %34, %19 : vector<8x16xi1>
    %cst_14 = arith.constant 0.000000e+00 : f32
    %36 = vector.broadcast %cst_14 : f32 to vector<8x16xf32>
    %37 = arith.maximumf %23, %36 : vector<8x16xf32>
    %38 = arith.mulf %23, %21 : vector<8x16xf32>
    %39 = arith.subf %37, %38 : vector<8x16xf32>
    %40 = math.absf %23 : vector<8x16xf32>
    %cst_15 = arith.constant 0.000000e+00 : f32
    %41 = vector.broadcast %cst_15 : f32 to vector<8x16xf32>
    %42 = arith.subf %41, %40 : vector<8x16xf32>
    %43 = math.exp %42 : vector<8x16xf32>
    %44 = math.log1p %43 : vector<8x16xf32>
    %45 = arith.addf %39, %44 : vector<8x16xf32>
    %c0_16 = arith.constant 0 : index
    %c0_17 = arith.constant 0 : index
    %c0_18 = arith.constant 0 : index
    %46 = vector.load %arg6[%c0_16, %c0_17, %c0_18] : memref<8x8x16xf32, #tpu.memory_space<vmem>>, vector<1x8x16xf32>
    %47 = vector.shape_cast %46 : vector<1x8x16xf32> to vector<8x16xf32>
    %cst_19 = arith.constant 0.000000e+00 : f32
    %48 = vector.broadcast %cst_19 : f32 to vector<8x16xf32>
    %49 = arith.select %26, %45, %48 : vector<8x16xi1>, vector<8x16xf32>
    %50 = arith.addf %47, %49 : vector<8x16xf32>
    %c0_20 = arith.constant 0 : index
    %c0_21 = arith.constant 0 : index
    %c0_22 = arith.constant 0 : index
    %51 = vector.load %arg6[%c0_20, %c0_21, %c0_22] : memref<8x8x16xf32, #tpu.memory_space<vmem>>, vector<1x8x16xf32>
    %52 = vector.shape_cast %51 : vector<1x8x16xf32> to vector<8x16xf32>
    %53 = vector.shape_cast %50 : vector<8x16xf32> to vector<1x8x16xf32>
    tpu.vector_store %arg6[%c0_20, %c0_21, %c0_22], %53 {strides = array<i32>} : memref<8x8x16xf32, #tpu.memory_space<vmem>>, vector<1x8x16xf32>,
    %cst_23 = arith.constant 1.000000e+00 : f32
    %54 = vector.broadcast %cst_23 : f32 to vector<8x16xf32>
    %55 = arith.subf %54, %21 : vector<8x16xf32>
    %cst_24 = arith.constant 0.000000e+00 : f32
    %56 = vector.broadcast %cst_24 : f32 to vector<8x16xf32>
    %57 = arith.subf %56, %55 : vector<8x16xf32>
    %58 = arith.negf %23 : vector<8x16xf32>
    %59 = math.exp %58 : vector<8x16xf32>
    %cst_25 = arith.constant 1.000000e+00 : f32
    %60 = vector.broadcast %cst_25 : f32 to vector<8x16xf32>
    %61 = arith.addf %60, %59 : vector<8x16xf32>
    %62 = arith.divf %60, %61 : vector<8x16xf32>
    %cst_26 = arith.constant 1.000000e+00 : f32
    %63 = vector.broadcast %cst_26 : f32 to vector<8x16xf32>
    %64 = arith.subf %63, %62 : vector<8x16xf32>
    %cst_27 = arith.constant 9.99999997E-7 : f32
    %65 = vector.broadcast %cst_27 : f32 to vector<8x16xf32>
    %66 = arith.addf %64, %65 : vector<8x16xf32>
    %67 = math.log %66 : vector<8x16xf32>
    %68 = arith.mulf %57, %67 : vector<8x16xf32>
    %c1 = arith.constant 1 : index
    %c0_28 = arith.constant 0 : index
    %c0_29 = arith.constant 0 : index
    %69 = vector.load %arg6[%c1, %c0_28, %c0_29] : memref<8x8x16xf32, #tpu.memory_space<vmem>>, vector<1x8x16xf32>
    %70 = vector.shape_cast %69 : vector<1x8x16xf32> to vector<8x16xf32>
    %cst_30 = arith.constant 0.000000e+00 : f32
    %71 = vector.broadcast %cst_30 : f32 to vector<8x16xf32>
    %72 = arith.select %29, %68, %71 : vector<8x16xi1>, vector<8x16xf32>
    %73 = arith.addf %70, %72 : vector<8x16xf32>
    %c1_31 = arith.constant 1 : index
    %c0_32 = arith.constant 0 : index
    %c0_33 = arith.constant 0 : index
    %74 = vector.load %arg6[%c1_31, %c0_32, %c0_33] : memref<8x8x16xf32, #tpu.memory_space<vmem>>, vector<1x8x16xf32>
    %75 = vector.shape_cast %74 : vector<1x8x16xf32> to vector<8x16xf32>
    %76 = vector.shape_cast %73 : vector<8x16xf32> to vector<1x8x16xf32>
    tpu.vector_store %arg6[%c1_31, %c0_32, %c0_33], %76 {strides = array<i32>} : memref<8x8x16xf32, #tpu.memory_space<vmem>>, vector<1x8x16xf32>,
    %c2 = arith.constant 2 : index
    %c0_34 = arith.constant 0 : index
    %c0_35 = arith.constant 0 : index
    %77 = vector.load %arg6[%c2, %c0_34, %c0_35] : memref<8x8x16xf32, #tpu.memory_space<vmem>>, vector<1x8x16xf32>
    %78 = vector.shape_cast %77 : vector<1x8x16xf32> to vector<8x16xf32>
    %cst_36 = arith.constant 0.000000e+00 : f32
    %79 = vector.broadcast %cst_36 : f32 to vector<8x16xf32>
    %80 = arith.select %35, %68, %79 : vector<8x16xi1>, vector<8x16xf32>
    %81 = arith.addf %78, %80 : vector<8x16xf32>
    %c2_37 = arith.constant 2 : index
    %c0_38 = arith.constant 0 : index
    %c0_39 = arith.constant 0 : index
    %82 = vector.load %arg6[%c2_37, %c0_38, %c0_39] : memref<8x8x16xf32, #tpu.memory_space<vmem>>, vector<1x8x16xf32>
    %83 = vector.shape_cast %82 : vector<1x8x16xf32> to vector<8x16xf32>
    %84 = vector.shape_cast %81 : vector<8x16xf32> to vector<1x8x16xf32>
    tpu.vector_store %arg6[%c2_37, %c0_38, %c0_39], %84 {strides = array<i32>} : memref<8x8x16xf32, #tpu.memory_space<vmem>>, vector<1x8x16xf32>,
    %c2_i32 = arith.constant 2 : i32
    %85 = arith.muli %c2_i32, %arg1 : i32
    %86 = arith.index_cast %85 : i32 to index
    %87 = memref.load %arg3[%86] : memref<6xf32, #tpu.memory_space<smem>>
    %c2_i32_40 = arith.constant 2 : i32
    %88 = arith.muli %c2_i32_40, %arg1 : i32
    %c1_i32_41 = arith.constant 1 : i32
    %89 = arith.addi %88, %c1_i32_41 : i32
    %90 = arith.index_cast %89 : i32 to index
    %91 = memref.load %arg3[%90] : memref<6xf32, #tpu.memory_space<smem>>
    %c0_42 = arith.constant 0 : index
    %c1_43 = arith.constant 1 : index
    %c0_44 = arith.constant 0 : index
    %c0_45 = arith.constant 0 : index
    %92 = vector.load %arg4[%c0_42, %c1_43, %c0_44, %c0_45] : memref<1x9x8x16xf32, #tpu.memory_space<vmem>>, vector<1x1x8x16xf32>
    %93 = vector.shape_cast %92 : vector<1x1x8x16xf32> to vector<8x16xf32>
    %94 = arith.negf %93 : vector<8x16xf32>
    %95 = math.exp %94 : vector<8x16xf32>
    %cst_46 = arith.constant 1.000000e+00 : f32
    %96 = vector.broadcast %cst_46 : f32 to vector<8x16xf32>
    %97 = arith.addf %96, %95 : vector<8x16xf32>
    %98 = arith.divf %96, %97 : vector<8x16xf32>
    %c0_47 = arith.constant 0 : index
    %c1_48 = arith.constant 1 : index
    %c0_49 = arith.constant 0 : index
    %c0_50 = arith.constant 0 : index
    %99 = vector.load %arg5[%c0_47, %c1_48, %c0_49, %c0_50] : memref<1x6x8x16xf32, #tpu.memory_space<vmem>>, vector<1x1x8x16xf32>
    %100 = vector.shape_cast %99 : vector<1x1x8x16xf32> to vector<8x16xf32>
    %101 = arith.subf %98, %100 : vector<8x16xf32>
    %c0_51 = arith.constant 0 : index
    %c2_52 = arith.constant 2 : index
    %c0_53 = arith.constant 0 : index
    %c0_54 = arith.constant 0 : index
    %102 = vector.load %arg4[%c0_51, %c2_52, %c0_53, %c0_54] : memref<1x9x8x16xf32, #tpu.memory_space<vmem>>, vector<1x1x8x16xf32>
    %103 = vector.shape_cast %102 : vector<1x1x8x16xf32> to vector<8x16xf32>
    %104 = arith.negf %103 : vector<8x16xf32>
    %105 = math.exp %104 : vector<8x16xf32>
    %cst_55 = arith.constant 1.000000e+00 : f32
    %106 = vector.broadcast %cst_55 : f32 to vector<8x16xf32>
    %107 = arith.addf %106, %105 : vector<8x16xf32>
    %108 = arith.divf %106, %107 : vector<8x16xf32>
    %c0_56 = arith.constant 0 : index
    %c2_57 = arith.constant 2 : index
    %c0_58 = arith.constant 0 : index
    %c0_59 = arith.constant 0 : index
    %109 = vector.load %arg5[%c0_56, %c2_57, %c0_58, %c0_59] : memref<1x6x8x16xf32, #tpu.memory_space<vmem>>, vector<1x1x8x16xf32>
    %110 = vector.shape_cast %109 : vector<1x1x8x16xf32> to vector<8x16xf32>
    %111 = arith.subf %108, %110 : vector<8x16xf32>
    %c0_60 = arith.constant 0 : index
    %c3 = arith.constant 3 : index
    %c0_61 = arith.constant 0 : index
    %c0_62 = arith.constant 0 : index
    %112 = vector.load %arg4[%c0_60, %c3, %c0_61, %c0_62] : memref<1x9x8x16xf32, #tpu.memory_space<vmem>>, vector<1x1x8x16xf32>
    %113 = vector.shape_cast %112 : vector<1x1x8x16xf32> to vector<8x16xf32>
    %c0_63 = arith.constant 0 : index
    %c3_64 = arith.constant 3 : index
    %c0_65 = arith.constant 0 : index
    %c0_66 = arith.constant 0 : index
    %114 = vector.load %arg5[%c0_63, %c3_64, %c0_65, %c0_66] : memref<1x6x8x16xf32, #tpu.memory_space<vmem>>, vector<1x1x8x16xf32>
    %115 = vector.shape_cast %114 : vector<1x1x8x16xf32> to vector<8x16xf32>
    %116 = vector.broadcast %87 : f32 to vector<8x16xf32>
    %117 = arith.mulf %115, %116 : vector<8x16xf32>
    %cst_67 = arith.constant 9.99999997E-7 : f32
    %118 = vector.broadcast %cst_67 : f32 to vector<8x16xf32>
    %119 = arith.addf %118, %117 : vector<8x16xf32>
    %120 = math.log %119 : vector<8x16xf32>
    %121 = arith.subf %113, %120 : vector<8x16xf32>
    %c0_68 = arith.constant 0 : index
    %c4 = arith.constant 4 : index
    %c0_69 = arith.constant 0 : index
    %c0_70 = arith.constant 0 : index
    %122 = vector.load %arg4[%c0_68, %c4, %c0_69, %c0_70] : memref<1x9x8x16xf32, #tpu.memory_space<vmem>>, vector<1x1x8x16xf32>
    %123 = vector.shape_cast %122 : vector<1x1x8x16xf32> to vector<8x16xf32>
    %c0_71 = arith.constant 0 : index
    %c4_72 = arith.constant 4 : index
    %c0_73 = arith.constant 0 : index
    %c0_74 = arith.constant 0 : index
    %124 = vector.load %arg5[%c0_71, %c4_72, %c0_73, %c0_74] : memref<1x6x8x16xf32, #tpu.memory_space<vmem>>, vector<1x1x8x16xf32>
    %125 = vector.shape_cast %124 : vector<1x1x8x16xf32> to vector<8x16xf32>
    %126 = vector.broadcast %91 : f32 to vector<8x16xf32>
    %127 = arith.mulf %125, %126 : vector<8x16xf32>
    %cst_75 = arith.constant 9.99999997E-7 : f32
    %128 = vector.broadcast %cst_75 : f32 to vector<8x16xf32>
    %129 = arith.addf %128, %127 : vector<8x16xf32>
    %130 = math.log %129 : vector<8x16xf32>
    %131 = arith.subf %123, %130 : vector<8x16xf32>
    %132 = arith.mulf %101, %101 : vector<8x16xf32>
    %133 = arith.mulf %111, %111 : vector<8x16xf32>
    %134 = arith.addf %132, %133 : vector<8x16xf32>
    %135 = arith.mulf %121, %121 : vector<8x16xf32>
    %136 = arith.addf %134, %135 : vector<8x16xf32>
    %137 = arith.mulf %131, %131 : vector<8x16xf32>
    %138 = arith.addf %136, %137 : vector<8x16xf32>
    %c3_76 = arith.constant 3 : index
    %c0_77 = arith.constant 0 : index
    %c0_78 = arith.constant 0 : index
    %139 = vector.load %arg6[%c3_76, %c0_77, %c0_78] : memref<8x8x16xf32, #tpu.memory_space<vmem>>, vector<1x8x16xf32>
    %140 = vector.shape_cast %139 : vector<1x8x16xf32> to vector<8x16xf32>
    %cst_79 = arith.constant 0.000000e+00 : f32
    %141 = vector.broadcast %cst_79 : f32 to vector<8x16xf32>
    %142 = arith.select %26, %138, %141 : vector<8x16xi1>, vector<8x16xf32>
    %143 = arith.addf %140, %142 : vector<8x16xf32>
    %c3_80 = arith.constant 3 : index
    %c0_81 = arith.constant 0 : index
    %c0_82 = arith.constant 0 : index
    %144 = vector.load %arg6[%c3_80, %c0_81, %c0_82] : memref<8x8x16xf32, #tpu.memory_space<vmem>>, vector<1x8x16xf32>
    %145 = vector.shape_cast %144 : vector<1x8x16xf32> to vector<8x16xf32>
    %146 = vector.shape_cast %143 : vector<8x16xf32> to vector<1x8x16xf32>
    tpu.vector_store %arg6[%c3_80, %c0_81, %c0_82], %146 {strides = array<i32>} : memref<8x8x16xf32, #tpu.memory_space<vmem>>, vector<1x8x16xf32>,
    %c0_83 = arith.constant 0 : index
    %c5 = arith.constant 5 : index
    %c0_84 = arith.constant 0 : index
    %c0_85 = arith.constant 0 : index
    %147 = vector.load %arg5[%c0_83, %c5, %c0_84, %c0_85] : memref<1x6x8x16xf32, #tpu.memory_space<vmem>>, vector<1x1x8x16xf32>
    %148 = vector.shape_cast %147 : vector<1x1x8x16xf32> to vector<8x16xf32>
    %149 = arith.fptosi %148 : vector<8x16xf32> to vector<8x16xi32>
    %c0_86 = arith.constant 0 : index
    %c5_87 = arith.constant 5 : index
    %c0_88 = arith.constant 0 : index
    %c0_89 = arith.constant 0 : index
    %150 = vector.load %arg4[%c0_86, %c5_87, %c0_88, %c0_89] : memref<1x9x8x16xf32, #tpu.memory_space<vmem>>, vector<1x1x8x16xf32>
    %151 = vector.shape_cast %150 : vector<1x1x8x16xf32> to vector<8x16xf32>
    %cst_90 = arith.constant 1.000000e+00 : f32
    %152 = vector.broadcast %cst_90 : f32 to vector<8x16xf32>
    %c0_i32_91 = arith.constant 0 : i32
    %153 = vector.broadcast %c0_i32_91 : i32 to vector<8x16xi32>
    %154 = arith.cmpi eq, %149, %153 : vector<8x16xi32>
    %cst_92 = arith.constant 0.000000e+00 : f32
    %155 = vector.broadcast %cst_92 : f32 to vector<8x16xf32>
    %156 = arith.select %154, %151, %155 : vector<8x16xi1>, vector<8x16xf32>
    %c1_i32_93 = arith.constant 1 : i32
    %c5_i32 = arith.constant 5 : i32
    %157 = arith.addi %c5_i32, %c1_i32_93 : i32
    %c0_94 = arith.constant 0 : index
    %158 = arith.index_cast %157 : i32 to index
    %c0_95 = arith.constant 0 : index
    %c0_96 = arith.constant 0 : index
    %159 = vector.load %arg4[%c0_94, %158, %c0_95, %c0_96] : memref<1x9x8x16xf32, #tpu.memory_space<vmem>>, vector<1x1x8x16xf32>
    %160 = vector.shape_cast %159 : vector<1x1x8x16xf32> to vector<8x16xf32>
    %161 = arith.maximumf %151, %160 : vector<8x16xf32>
    %162 = arith.subf %151, %161 : vector<8x16xf32>
    %163 = math.exp %162 : vector<8x16xf32>
    %164 = arith.mulf %152, %163 : vector<8x16xf32>
    %165 = arith.subf %160, %161 : vector<8x16xf32>
    %166 = math.exp %165 : vector<8x16xf32>
    %167 = arith.addf %164, %166 : vector<8x16xf32>
    %168 = vector.broadcast %c1_i32_93 : i32 to vector<8x16xi32>
    %169 = arith.cmpi eq, %149, %168 : vector<8x16xi32>
    %cst_97 = arith.constant 0.000000e+00 : f32
    %170 = vector.broadcast %cst_97 : f32 to vector<8x16xf32>
    %171 = arith.select %169, %160, %170 : vector<8x16xi1>, vector<8x16xf32>
    %172 = arith.addf %156, %171 : vector<8x16xf32>
    %c2_i32_98 = arith.constant 2 : i32
    %c5_i32_99 = arith.constant 5 : i32
    %173 = arith.addi %c5_i32_99, %c2_i32_98 : i32
    %c0_100 = arith.constant 0 : index
    %174 = arith.index_cast %173 : i32 to index
    %c0_101 = arith.constant 0 : index
    %c0_102 = arith.constant 0 : index
    %175 = vector.load %arg4[%c0_100, %174, %c0_101, %c0_102] : memref<1x9x8x16xf32, #tpu.memory_space<vmem>>, vector<1x1x8x16xf32>
    %176 = vector.shape_cast %175 : vector<1x1x8x16xf32> to vector<8x16xf32>
    %177 = arith.maximumf %161, %176 : vector<8x16xf32>
    %178 = arith.subf %161, %177 : vector<8x16xf32>
    %179 = math.exp %178 : vector<8x16xf32>
    %180 = arith.mulf %167, %179 : vector<8x16xf32>
    %181 = arith.subf %176, %177 : vector<8x16xf32>
    %182 = math.exp %181 : vector<8x16xf32>
    %183 = arith.addf %180, %182 : vector<8x16xf32>
    %184 = vector.broadcast %c2_i32_98 : i32 to vector<8x16xi32>
    %185 = arith.cmpi eq, %149, %184 : vector<8x16xi32>
    %cst_103 = arith.constant 0.000000e+00 : f32
    %186 = vector.broadcast %cst_103 : f32 to vector<8x16xf32>
    %187 = arith.select %185, %176, %186 : vector<8x16xi1>, vector<8x16xf32>
    %188 = arith.addf %172, %187 : vector<8x16xf32>
    %c3_i32 = arith.constant 3 : i32
    %c5_i32_104 = arith.constant 5 : i32
    %189 = arith.addi %c5_i32_104, %c3_i32 : i32
    %c0_105 = arith.constant 0 : index
    %190 = arith.index_cast %189 : i32 to index
    %c0_106 = arith.constant 0 : index
    %c0_107 = arith.constant 0 : index
    %191 = vector.load %arg4[%c0_105, %190, %c0_106, %c0_107] : memref<1x9x8x16xf32, #tpu.memory_space<vmem>>, vector<1x1x8x16xf32>
    %192 = vector.shape_cast %191 : vector<1x1x8x16xf32> to vector<8x16xf32>
    %193 = arith.maximumf %177, %192 : vector<8x16xf32>
    %194 = arith.subf %177, %193 : vector<8x16xf32>
    %195 = math.exp %194 : vector<8x16xf32>
    %196 = arith.mulf %183, %195 : vector<8x16xf32>
    %197 = arith.subf %192, %193 : vector<8x16xf32>
    %198 = math.exp %197 : vector<8x16xf32>
    %199 = arith.addf %196, %198 : vector<8x16xf32>
    %200 = vector.broadcast %c3_i32 : i32 to vector<8x16xi32>
    %201 = arith.cmpi eq, %149, %200 : vector<8x16xi32>
    %cst_108 = arith.constant 0.000000e+00 : f32
    %202 = vector.broadcast %cst_108 : f32 to vector<8x16xf32>
    %203 = arith.select %201, %192, %202 : vector<8x16xi1>, vector<8x16xf32>
    %204 = arith.addf %188, %203 : vector<8x16xf32>
    %c3_i32_109 = arith.constant 3 : i32
    %205 = math.log %199 : vector<8x16xf32>
    %206 = arith.addf %193, %205 : vector<8x16xf32>
    %207 = arith.subf %206, %204 : vector<8x16xf32>
    %c4_110 = arith.constant 4 : index
    %c0_111 = arith.constant 0 : index
    %c0_112 = arith.constant 0 : index
    %208 = vector.load %arg6[%c4_110, %c0_111, %c0_112] : memref<8x8x16xf32, #tpu.memory_space<vmem>>, vector<1x8x16xf32>
    %209 = vector.shape_cast %208 : vector<1x8x16xf32> to vector<8x16xf32>
    %cst_113 = arith.constant 0.000000e+00 : f32
    %210 = vector.broadcast %cst_113 : f32 to vector<8x16xf32>
    %211 = arith.select %26, %207, %210 : vector<8x16xi1>, vector<8x16xf32>
    %212 = arith.addf %209, %211 : vector<8x16xf32>
    %c4_114 = arith.constant 4 : index
    %c0_115 = arith.constant 0 : index
    %c0_116 = arith.constant 0 : index
    %213 = vector.load %arg6[%c4_114, %c0_115, %c0_116] : memref<8x8x16xf32, #tpu.memory_space<vmem>>, vector<1x8x16xf32>
    %214 = vector.shape_cast %213 : vector<1x8x16xf32> to vector<8x16xf32>
    %215 = vector.shape_cast %212 : vector<8x16xf32> to vector<1x8x16xf32>
    tpu.vector_store %arg6[%c4_114, %c0_115, %c0_116], %215 {strides = array<i32>} : memref<8x8x16xf32, #tpu.memory_space<vmem>>, vector<1x8x16xf32>,
    %c5_117 = arith.constant 5 : index
    %c0_118 = arith.constant 0 : index
    %c0_119 = arith.constant 0 : index
    %216 = vector.load %arg6[%c5_117, %c0_118, %c0_119] : memref<8x8x16xf32, #tpu.memory_space<vmem>>, vector<1x8x16xf32>
    %217 = vector.shape_cast %216 : vector<1x8x16xf32> to vector<8x16xf32>
    %218 = arith.extui %26 : vector<8x16xi1> to vector<8x16xi32>
    %219 = arith.sitofp %218 : vector<8x16xi32> to vector<8x16xf32>
    %220 = arith.addf %217, %219 : vector<8x16xf32>
    %c5_120 = arith.constant 5 : index
    %c0_121 = arith.constant 0 : index
    %c0_122 = arith.constant 0 : index
    %221 = vector.load %arg6[%c5_120, %c0_121, %c0_122] : memref<8x8x16xf32, #tpu.memory_space<vmem>>, vector<1x8x16xf32>
    %222 = vector.shape_cast %221 : vector<1x8x16xf32> to vector<8x16xf32>
    %223 = vector.shape_cast %220 : vector<8x16xf32> to vector<1x8x16xf32>
    tpu.vector_store %arg6[%c5_120, %c0_121, %c0_122], %223 {strides = array<i32>} : memref<8x8x16xf32, #tpu.memory_space<vmem>>, vector<1x8x16xf32>,
    %c6 = arith.constant 6 : index
    %c0_123 = arith.constant 0 : index
    %c0_124 = arith.constant 0 : index
    %224 = vector.load %arg6[%c6, %c0_123, %c0_124] : memref<8x8x16xf32, #tpu.memory_space<vmem>>, vector<1x8x16xf32>
    %225 = vector.shape_cast %224 : vector<1x8x16xf32> to vector<8x16xf32>
    %226 = arith.extui %29 : vector<8x16xi1> to vector<8x16xi32>
    %227 = arith.sitofp %226 : vector<8x16xi32> to vector<8x16xf32>
    %228 = arith.addf %225, %227 : vector<8x16xf32>
    %c6_125 = arith.constant 6 : index
    %c0_126 = arith.constant 0 : index
    %c0_127 = arith.constant 0 : index
    %229 = vector.load %arg6[%c6_125, %c0_126, %c0_127] : memref<8x8x16xf32, #tpu.memory_space<vmem>>, vector<1x8x16xf32>
    %230 = vector.shape_cast %229 : vector<1x8x16xf32> to vector<8x16xf32>
    %231 = vector.shape_cast %228 : vector<8x16xf32> to vector<1x8x16xf32>
    tpu.vector_store %arg6[%c6_125, %c0_126, %c0_127], %231 {strides = array<i32>} : memref<8x8x16xf32, #tpu.memory_space<vmem>>, vector<1x8x16xf32>,
    %c7 = arith.constant 7 : index
    %c0_128 = arith.constant 0 : index
    %c0_129 = arith.constant 0 : index
    %232 = vector.load %arg6[%c7, %c0_128, %c0_129] : memref<8x8x16xf32, #tpu.memory_space<vmem>>, vector<1x8x16xf32>
    %233 = vector.shape_cast %232 : vector<1x8x16xf32> to vector<8x16xf32>
    %234 = arith.extui %35 : vector<8x16xi1> to vector<8x16xi32>
    %235 = arith.sitofp %234 : vector<8x16xi32> to vector<8x16xf32>
    %236 = arith.addf %233, %235 : vector<8x16xf32>
    %c7_130 = arith.constant 7 : index
    %c0_131 = arith.constant 0 : index
    %c0_132 = arith.constant 0 : index
    %237 = vector.load %arg6[%c7_130, %c0_131, %c0_132] : memref<8x8x16xf32, #tpu.memory_space<vmem>>, vector<1x8x16xf32>
    %238 = vector.shape_cast %237 : vector<1x8x16xf32> to vector<8x16xf32>
    %239 = vector.shape_cast %236 : vector<8x16xf32> to vector<1x8x16xf32>
    tpu.vector_store %arg6[%c7_130, %c0_131, %c0_132], %239 {strides = array<i32>} : memref<8x8x16xf32, #tpu.memory_space<vmem>>, vector<1x8x16xf32>,
    return
  }
  func.func @transform_0(%arg0: i32, %arg1: i32, %arg2: i32) -> i32 {
    %c0_i32 = arith.constant 0 : i32
    %c0_i32_0 = arith.constant 0 : i32
    return %c0_i32 : i32
  }
  func.func @transform_1(%arg0: i32, %arg1: i32, %arg2: i32) -> (i32, i32, i32, i32) {
    %c1_i32 = arith.constant 1 : i32
    %0 = arith.muli %arg0, %c1_i32 : i32
    %1 = arith.addi %0, %arg2 : i32
    %c0_i32 = arith.constant 0 : i32
    %2 = arith.minsi %1, %c0_i32 : i32
    %c0_i32_0 = arith.constant 0 : i32
    %c0_i32_1 = arith.constant 0 : i32
    %c0_i32_2 = arith.constant 0 : i32
    return %arg1, %c0_i32_0, %c0_i32_1, %2 : i32, i32, i32, i32
  }
  func.func @transform_2(%arg0: i32, %arg1: i32, %arg2: i32) -> (i32, i32, i32, i32) {
    %c1_i32 = arith.constant 1 : i32
    %0 = arith.muli %arg0, %c1_i32 : i32
    %1 = arith.addi %0, %arg2 : i32
    %c0_i32 = arith.constant 0 : i32
    %2 = arith.minsi %1, %c0_i32 : i32
    %c0_i32_0 = arith.constant 0 : i32
    %c0_i32_1 = arith.constant 0 : i32
    %c0_i32_2 = arith.constant 0 : i32
    return %arg1, %c0_i32_0, %c0_i32_1, %2 : i32, i32, i32, i32
  }
  func.func @transform_3(%arg0: i32, %arg1: i32, %arg2: i32) -> (i32, i32, i32) {
    %c0_i32 = arith.constant 0 : i32
    %c0_i32_0 = arith.constant 0 : i32
    %c0_i32_1 = arith.constant 0 : i32
    return %arg0, %c0_i32, %c0_i32_0 : i32, i32, i32
  }
}

</mosaic_0001>

<llo_original>
// kernel: tpu_custom_call.1
$region0: #{tpu_custom_call.1}
  #allocation0 [shape = 'u32[]', space=smem, size = 0x4, offset = 0x4, fixed_abs, tag = 'smem constant byte address 0x4 - core index']
  #allocation1 [shape = 'u32[144,128]{1,0:T(1,128)}', space=vmem, size = 0x12000, scoped, tag = 'internal scratch']
  %s0 = inlined_call_operand.hbm [shape: f32[6], index: 0, kind: input, shape index: {}]
  %s1 = inlined_call_operand.hbm [shape: f32[3,9,8,16], index: 1, kind: input, shape index: {}]
  %s2 = inlined_call_operand.hbm [shape: f32[3,6,8,16], index: 2, kind: input, shape index: {}]
  %s3 = inlined_call_operand.hbm [shape: f32[8,8,16], index: 3, kind: output, shape index: {}]
  %s4 = sld [smem:[#allocation0]]
  $region61: #{tpu_custom_call.1} parent=0
    _
  %s6 = ssub.s32 1, %s4
  %s7 = scalar_select 0, %s6, %s4
  $region1: #{tpu_custom_call.1} parent=0
    #allocation2 [shape = 'u8[512]{0}', space=smem, size = 0x200, scoped, tag = 'input window, operand 0, single buffered']
    #allocation3 [shape = 's32[2]{0}', space=sflag, size = 0x8, scoped, tag = 'scoped memory for tpu_custom_call.1']
    #allocation4 [shape = 's32[2]{0}', space=sflag, size = 0x8, scoped, tag = 'scoped memory for tpu_custom_call.1']
    #allocation5 [shape = 's32[2]{0}', space=sflag, size = 0x8, scoped, tag = 'scoped memory for tpu_custom_call.1']
    #allocation6 [shape = 'u8[73728]{0}', space=vmem, size = 0x12000, scoped, tag = 'input window, operand 1']
    #allocation7 [shape = 'u8[49152]{0}', space=vmem, size = 0xc000, scoped, tag = 'input window, operand 2']
    #allocation8 [shape = 's32[2]{0}', space=sflag, size = 0x8, scoped, tag = 'scoped memory for tpu_custom_call.1']
    #allocation9 [shape = 'u8[32768]{0}', space=vmem, size = 0x8000, scoped, tag = 'output window, operand 0, single buffered']
    %8 = vsyncpa [#allocation5], 0
    %9 = vsyncpa [#allocation3], 0
    %s10 = scalar_lea.sflag [#allocation3], 1
    %11 = vsyncpa %s10, 0
    %12 = vsyncpa [#allocation8], 0
    %s13 = scalar_lea.sflag [#allocation8], 1
    %14 = vsyncpa %s13, 0
    %15 = vsyncpa [#allocation4], 0
    loop: start=0, step=1, limit=5
    $region2: #{tpu_custom_call.1} parent=1 // loop_pre_header
      _
    $region3: #{tpu_custom_call.1} parent=1 // loop_header
      %s17 = sphi 0, %s21
      %p18 = scmp.ge.s32.totalorder %s17, 5
      %s24 = sphi 0, %s43
      %s25 = sphi 0, %s39
      %s26 = sphi 0, %s35
      %s27 = sphi 0, %s24
      %s28 = sphi 0, %s25
      %s29 = sphi 0, %s26
      %s30 = sphi 0, %s27
      %s31 = sphi 0, %s28
      %s32 = sphi 0, %s29
      %s44 = sphi 0, %s44
      %s46 = sphi 0, %s44
      %s47 = sphi 0, %s46
      %s61 = sphi 0, %s47
      %s75 = sphi 0, %s77
      %s78 = sphi 0, %s75
      %s79 = sphi 0, %s78
      %s95 = sphi 0, %s79
      %s109 = sphi 0, %s111
      %s112 = sphi 0, %s109
      %s113 = sphi 0, %s112
      %s129 = sphi 0, %s113
      %s135 = sphi 0, %s137
      %s138 = sphi 0, %s135
      %s139 = sphi 0, %s138
      %s155 = sphi 0, %s139
    $region4: #{tpu_custom_call.1} parent=1 // loop_header_branch
      %20 = sbr.rel (%p18) target = $region8
    $region5: #{tpu_custom_call.1} parent=1 // loop_body
      %s22 = ssub.s32 %s17, 1
      %s23 = ssub.s32 %s17, 2
      %s33 = sadd.s32 1, %s26
      %p34 = scmp.ge.s32.totalorder %s33, 1
      %s35 = scalar_select %p34, 0, %s33
      %s36 = sadd.s32 1, %s25
      %s37 = scalar_select %p34, %s36, %s25
      %p38 = scmp.ge.s32.totalorder %s37, 3
      %s39 = scalar_select %p38, 0, %s37
      %s40 = sadd.s32 1, %s24
      %s41 = scalar_select %p38, %s40, %s24
      %p42 = scmp.ge.s32.totalorder %s41, 1
      %s43 = scalar_select %p42, 0, %s41
      %s45 = sadd.s32 %s44, 1
      %p48 = scmp.eq.s32.totalorder %s17, 2
      %p49 = scmp.ne.s32.totalorder %s44, %s46
      %p50 = scmp.eq.s32.totalorder %s17, 0
      %p51 = por %p49, %p50
      %p52 = scmp.ne.s32.totalorder %s44, %s46
      %p53 = scmp.eq.s32.totalorder %s22, 2
      %p54 = por %p52, %p53
      %p55 = scmp.ne.s32.totalorder %s46, %s47
      %p56 = scmp.eq.s32.totalorder %s22, 0
      %p57 = por %p55, %p56
      %p58 = scmp.ne.s32.totalorder %s46, %s47
      %p59 = scmp.eq.s32.totalorder %s23, 2
      %p60 = por %p58, %p59
      %p62 = scmp.ne.s32.totalorder %s47, %s61
      %p63 = scmp.eq.s32.totalorder %s23, 0
      %p64 = por %p62, %p63
      %s65 = sadd.s32 %s24, %s26
      %p66 = scmp.lt.s32.totalorder %s65, 0
      %s67 = scalar_select %p66, %s65, 0
      %s68 = sadd.s32 %s43, %s35
      %p69 = scmp.lt.s32.totalorder %s68, 0
      %s70 = scalar_select %p69, %s68, 0
      %s71 = ssub.s32 %s25, %s39
      %s72 = ssub.s32 %s67, %s70
      %s73 = sor.u32 %s71, %s72
      %p74 = scmp.eq.s32.totalorder %s73, 0
      %s76 = sadd.s32 %s75, 1
      %s77 = scalar_select %p74, %s75, %s76
      %p80 = pneg %p74
      %p81 = scmp.eq.s32.totalorder %s17, 2
      %p82 = por %p80, %p81
      %p83 = scmp.ne.s32.totalorder %s75, %s78
      %p84 = scmp.eq.s32.totalorder %s17, 0
      %p85 = por %p83, %p84
      %p86 = scmp.ne.s32.totalorder %s75, %s78
      %p87 = scmp.eq.s32.totalorder %s22, 2
      %p88 = por %p86, %p87
      %p89 = scmp.ne.s32.totalorder %s78, %s79
      %p90 = scmp.eq.s32.totalorder %s22, 0
      %p91 = por %p89, %p90
      %p92 = scmp.ne.s32.totalorder %s78, %s79
      %p93 = scmp.eq.s32.totalorder %s23, 2
      %p94 = por %p92, %p93
      %p96 = scmp.ne.s32.totalorder %s79, %s95
      %p97 = scmp.eq.s32.totalorder %s23, 0
      %p98 = por %p96, %p97
      %s99 = sadd.s32 %s24, %s26
      %p100 = scmp.lt.s32.totalorder %s99, 0
      %s101 = scalar_select %p100, %s99, 0
      %s102 = sadd.s32 %s43, %s35
      %p103 = scmp.lt.s32.totalorder %s102, 0
      %s104 = scalar_select %p103, %s102, 0
      %s105 = ssub.s32 %s25, %s39
      %s106 = ssub.s32 %s101, %s104
      %s107 = sor.u32 %s105, %s106
      %p108 = scmp.eq.s32.totalorder %s107, 0
      %s110 = sadd.s32 %s109, 1
      %s111 = scalar_select %p108, %s109, %s110
      %p114 = pneg %p108
      %p115 = scmp.eq.s32.totalorder %s17, 2
      %p116 = por %p114, %p115
      %p117 = scmp.ne.s32.totalorder %s109, %s112
      %p118 = scmp.eq.s32.totalorder %s17, 0
      %p119 = por %p117, %p118
      %p120 = scmp.ne.s32.totalorder %s109, %s112
      %p121 = scmp.eq.s32.totalorder %s22, 2
      %p122 = por %p120, %p121
      %p123 = scmp.ne.s32.totalorder %s112, %s113
      %p124 = scmp.eq.s32.totalorder %s22, 0
      %p125 = por %p123, %p124
      %p126 = scmp.ne.s32.totalorder %s112, %s113
      %p127 = scmp.eq.s32.totalorder %s23, 2
      %p128 = por %p126, %p127
      %p130 = scmp.ne.s32.totalorder %s113, %s129
      %p131 = scmp.eq.s32.totalorder %s23, 0
      %p132 = por %p130, %p131
      %s133 = ssub.s32 %s24, %s43
      %p134 = scmp.eq.s32.totalorder %s133, 0
      %s136 = sadd.s32 %s135, 1
      %s137 = scalar_select %p134, %s135, %s136
      %p140 = pneg %p134
      %p141 = scmp.eq.s32.totalorder %s17, 2
      %p142 = por %p140, %p141
      %p143 = scmp.ne.s32.totalorder %s135, %s138
      %p144 = scmp.eq.s32.totalorder %s17, 0
      %p145 = por %p143, %p144
      %p146 = scmp.ne.s32.totalorder %s135, %s138
      %p147 = scmp.eq.s32.totalorder %s22, 2
      %p148 = por %p146, %p147
      %p149 = scmp.ne.s32.totalorder %s138, %s139
      %p150 = scmp.eq.s32.totalorder %s22, 0
      %p151 = por %p149, %p150
      %p152 = scmp.ne.s32.totalorder %s138, %s139
      %p153 = scmp.eq.s32.totalorder %s23, 2
      %p154 = por %p152, %p153
      %p156 = scmp.ne.s32.totalorder %s139, %s155
      %p157 = scmp.eq.s32.totalorder %s23, 0
      %p158 = por %p156, %p157
      %p159 = scmp.le.s32.totalorder 1, %s17
      %p160 = scmp.lt.s32.totalorder %s17, 4
      %p161 = pnand %p159, %p160
      %p162 = pneg %p161
      // Predicated region
      $region9: #{tpu_custom_call.1} parent=5 // pred_check
        _
      $region10: #{tpu_custom_call.1} parent=5 // pred_check_branch
        %164 = sbr.rel (%p161) target = $region12
      $region11: #{tpu_custom_call.1} parent=5 // pred_region
        %s165 = ssub.s32 %s17, 1
        // Predicated region
        $region13: #{tpu_custom_call.1} parent=11 // pred_check
          %p166 = pneg %p57
        $region14: #{tpu_custom_call.1} parent=11 // pred_check_branch
          %168 = sbr.rel (%p166) target = $region16
        $region15: #{tpu_custom_call.1} parent=11 // pred_region
          %s170 = ssub.s32 16, 16
          %171 = vsyncadd [#allocation5], %s170
          %174 = dma.hbm_to_smem %s0, 16, [#allocation2], [#allocation5]
        $region16: #{tpu_custom_call.1} parent=11 // pred_fallthru
          _
      $region12: #{tpu_custom_call.1} parent=5 // pred_fallthru
        _
      %p175 = scmp.lt.s32.totalorder %s17, 3
      // Predicated region
      $region17: #{tpu_custom_call.1} parent=5 // pred_check
        %p176 = pneg %p175
      $region18: #{tpu_custom_call.1} parent=5 // pred_check_branch
        %178 = sbr.rel (%p176) target = $region20
      $region19: #{tpu_custom_call.1} parent=5 // pred_region
        // Predicated region
        $region21: #{tpu_custom_call.1} parent=19 // pred_check
          %p179 = pneg %p85
        $region22: #{tpu_custom_call.1} parent=19 // pred_check_branch
          %181 = sbr.rel (%p179) target = $region24
        $region23: #{tpu_custom_call.1} parent=19 // pred_region
          %s182 = sand.u32 %s75, 1
          %s183 = scalar_lea.sflag [#allocation3], %s182
          %s184 = sand.u32 %s75, 1
          %s185 = smul.addr %s184, 72
          %s186 = scalar_lea.vmem [#allocation6], %s185
          %s187 = sadd.s32 %s24, %s26
          %p188 = scmp.lt.s32.totalorder %s187, 0
          %s189 = scalar_select %p188, %s187, 0
          %s191 = ssub.s32 1152, 1152
          %192 = vsyncadd %s183, %s191
          %s193 = smul.addr %s25, 9
          %s194 = sadd.s32 %s189, %s193
          %s195 = smul.addr %s194, 128
          %s196 = scalar_lea.hbm %s1, %s195
          %s197 = sshll.u32 %s186, 4
          %s198 = int_to_ptr.vmem [resolvable:$true] %s197
          %203 = dma.hbm_to_vmem [thread:$0]  %s196, 1152, %s198, %s183, 128, 128, 8
        $region24: #{tpu_custom_call.1} parent=19 // pred_fallthru
          _
        // Predicated region
        $region25: #{tpu_custom_call.1} parent=19 // pred_check
          %p204 = pneg %p119
        $region26: #{tpu_custom_call.1} parent=19 // pred_check_branch
          %206 = sbr.rel (%p204) target = $region28
        $region27: #{tpu_custom_call.1} parent=19 // pred_region
          %s207 = sand.u32 %s109, 1
          %s208 = scalar_lea.sflag [#allocation8], %s207
          %s209 = sand.u32 %s109, 1
          %s210 = smul.addr %s209, 48
          %s211 = scalar_lea.vmem [#allocation7], %s210
          %s212 = sadd.s32 %s24, %s26
          %p213 = scmp.lt.s32.totalorder %s212, 0
          %s214 = scalar_select %p213, %s212, 0
          %s216 = ssub.s32 768, 768
          %217 = vsyncadd %s208, %s216
          %s218 = smul.addr %s25, 6
          %s219 = sadd.s32 %s214, %s218
          %s220 = smul.addr %s219, 128
          %s221 = scalar_lea.hbm %s2, %s220
          %s222 = sshll.u32 %s211, 4
          %s223 = int_to_ptr.vmem [resolvable:$true] %s222
          %228 = dma.hbm_to_vmem [thread:$0]  %s221, 768, %s223, %s208, 128, 128, 8
        $region28: #{tpu_custom_call.1} parent=19 // pred_fallthru
          _
      $region20: #{tpu_custom_call.1} parent=5 // pred_fallthru
        _
      %p229 = scmp.le.s32.totalorder 1, %s17
      %p230 = scmp.lt.s32.totalorder %s17, 4
      %p231 = pnand %p229, %p230
      %p232 = pneg %p231
      // Predicated region
      $region29: #{tpu_custom_call.1} parent=5 // pred_check
        _
      $region30: #{tpu_custom_call.1} parent=5 // pred_check_branch
        %234 = sbr.rel (%p231) target = $region32
      $region31: #{tpu_custom_call.1} parent=5 // pred_region
        %s235 = ssub.s32 %s17, 1
        // Predicated region
        $region33: #{tpu_custom_call.1} parent=31 // pred_check
          %p236 = pneg %p57
        $region34: #{tpu_custom_call.1} parent=31 // pred_check_branch
          %238 = sbr.rel (%p236) target = $region36
        $region35: #{tpu_custom_call.1} parent=31 // pred_region
          %239 = dma.done [#allocation5], 16
        $region36: #{tpu_custom_call.1} parent=31 // pred_fallthru
          _
        %s240 = sand.u32 %s78, 1
        %s241 = scalar_lea.sflag [#allocation3], %s240
        %s242 = sand.u32 %s78, 1
        %s243 = smul.addr %s242, 72
        %s244 = scalar_lea.vmem [#allocation6], %s243
        // Predicated region
        $region37: #{tpu_custom_call.1} parent=31 // pred_check
          %p245 = pneg %p91
        $region38: #{tpu_custom_call.1} parent=31 // pred_check_branch
          %247 = sbr.rel (%p245) target = $region40
        $region39: #{tpu_custom_call.1} parent=31 // pred_region
          %248 = dma.done %s241, 1152
        $region40: #{tpu_custom_call.1} parent=31 // pred_fallthru
          _
        %s249 = sand.u32 %s112, 1
        %s250 = scalar_lea.sflag [#allocation8], %s249
        %s251 = sand.u32 %s112, 1
        %s252 = smul.addr %s251, 48
        %s253 = scalar_lea.vmem [#allocation7], %s252
        // Predicated region
        $region41: #{tpu_custom_call.1} parent=31 // pred_check
          %p254 = pneg %p125
        $region42: #{tpu_custom_call.1} parent=31 // pred_check_branch
          %256 = sbr.rel (%p254) target = $region44
        $region43: #{tpu_custom_call.1} parent=31 // pred_region
          %257 = dma.done %s250, 768
        $region44: #{tpu_custom_call.1} parent=31 // pred_fallthru
          _
        %258 = sfence
        %p259 = pneg %p57
        %p260 = pneg %p54
        %s261 = sand.u32 %s78, 1
        %s262 = scalar_lea.sflag [#allocation3], %s261
        %s263 = sand.u32 %s78, 1
        %s264 = smul.addr %s263, 72
        %s265 = scalar_lea.vmem [#allocation6], %s264
        %p266 = pneg %p91
        %p267 = pneg %p88
        %s268 = sand.u32 %s112, 1
        %s269 = scalar_lea.sflag [#allocation8], %s268
        %s270 = sand.u32 %s112, 1
        %s271 = smul.addr %s270, 48
        %s272 = scalar_lea.vmem [#allocation7], %s271
        %p273 = pneg %p125
        %p274 = pneg %p122
        %p275 = pneg %p151
        %p276 = pneg %p148
        %s277 = sadd.s32 %s27, %s29
        %p278 = scmp.lt.s32.totalorder %s277, 0
        %s279 = scalar_select %p278, %s277, 0
        %s280 = sadd.s32 %s27, %s29
        %p281 = scmp.lt.s32.totalorder %s280, 0
        %s282 = scalar_select %p281, %s280, 0
        %s283 = smul.u32 8, %s27
        %p284 = scmp.eq.s32.totalorder %s28, 0
        %p285 = scmp.eq.s32.totalorder %s29, 0
        %p286 = pnand %p284, %p285
        %p287 = pneg %p286
        // Predicated region
        $region45: #{tpu_custom_call.1} parent=31 // pred_check
          _
        $region46: #{tpu_custom_call.1} parent=31 // pred_check_branch
          %289 = sbr.rel (%p286) target = $region48
        $region47: #{tpu_custom_call.1} parent=31 // pred_region
          %vm290 = vcmask 130048
          %291 = vst.msk [vmem:[#allocation9] sm:$0xff] %vm290, 0.0
          %292 = vst.msk [vmem:[#allocation9 + $0x8] sm:$0xff] %vm290, 0.0
          %293 = vst.msk [vmem:[#allocation9 + $0x10] sm:$0xff] %vm290, 0.0
          %294 = vst.msk [vmem:[#allocation9 + $0x18] sm:$0xff] %vm290, 0.0
          %295 = vst.msk [vmem:[#allocation9 + $0x20] sm:$0xff] %vm290, 0.0
          %296 = vst.msk [vmem:[#allocation9 + $0x28] sm:$0xff] %vm290, 0.0
          %297 = vst.msk [vmem:[#allocation9 + $0x30] sm:$0xff] %vm290, 0.0
          %298 = vst.msk [vmem:[#allocation9 + $0x38] sm:$0xff] %vm290, 0.0
        $region48: #{tpu_custom_call.1} parent=31 // pred_fallthru
          _
        %s299 = sadd.s32 %s27, %s29
        %v300 = vlaneseq
        %v301 = vand.u32 %v300, 127
        %v302 = vlaneseq
        %v303 = vshrl.u32 %v302, 7
        %s304 = smul.u32 %s299, 16
        %v305 = vstv %s304
        %v306 = vadd.s32 %v305, %v301
        %v307 = vmul.u32 %v303, 16
        %v308 = vadd.s32 %v307, %v306
        %vm309 = vcmp.lt.s32.totalorder %v306, 16
        %vm310 = vcmp.lt.s32.totalorder %v308, 128
        %vm311 = vmand %vm309, %vm310
        %v312 = vld [vmem:[%s253] sm:$0xff]
        %v313 = vld [vmem:[%s244] sm:$0xff]
        %vm314 = vcmp.eq.f32.partialorder %v312, 1.0
        %vm315 = vmand %vm314, %vm311
        %vm316 = vcmp.eq.f32.partialorder %v312, 0.0
        %vm317 = vmand %vm316, %vm311
        %vm318 = vcmp.gt.f32.partialorder %v312, 0.0
        %vm319 = vcmp.lt.f32.partialorder %v312, 1.0
        %vm320 = vmand %vm318, %vm319
        %vm321 = vmand %vm320, %vm311
        %v322 = vmax.f32 %v313, 0.0
        %v323 = vmul.f32 %v313, %v312
        %v324 = vsub.f32 %v322, %v323
        %v325 = vand.u32 2147483647, %v313
        %v326 = vsub.f32 0.0, %v325
        %v327 = vmul.f32 %v326, 1.442695
        %v328 = vpow.pop %v327
        %v329 = vadd.f32 %v328, 1.0
        %v330 = vlog2.pop %v329
        %v331 = vmul.f32 %v330, 0.6931472
        %v332 = vmul.f32 -0.5, %v328
        %v333 = vadd.f32 %v332, 1.0
        %v334 = vmul.f32 %v333, %v328
        %v335 = vand.u32 2147483647, %v328
        %vm336 = vcmp.lt.f32.partialorder %v335, 0.0004427343
        %v337 = vsel %vm336, %v334, %v331
        %v338 = vadd.f32 %v324, %v337
        %v339 = vld [vmem:[#allocation9] sm:$0xff]
        %v340 = vsel %vm315, %v338, 0.0
        %v341 = vadd.f32 %v339, %v340
        %vm342 = vcmask 130048
        %343 = vst.msk [vmem:[#allocation9] sm:$0xff] %vm342, %v341
        %v344 = vsub.f32 1.0, %v312
        %v345 = vsub.f32 0.0, %v344
        %v346 = vxor.u32 %v313, 2147483648
        %v347 = vmul.f32 %v346, 1.442695
        %v348 = vpow.pop %v347
        %v349 = vadd.f32 %v348, 1.0
        %v350 = vrcp.pop %v349
        %v351 = vmul.f32 1.0, %v350
        %v352 = vsub.f32 1.0, %v351
        %v353 = vadd.f32 %v352, 1e-06
        %v354 = vlog2.pop %v353
        %v355 = vmul.f32 %v354, 0.6931472
        %v356 = vmul.f32 %v345, %v355
        %s357 = scalar_lea.vmem [#allocation9], 8
        %v358 = vld [vmem:[%s357] sm:$0xff]
        %v359 = vsel %vm317, %v356, 0.0
        %v360 = vadd.f32 %v358, %v359
        %361 = vst.msk [vmem:[%s357] sm:$0xff] %vm342, %v360
        %s362 = scalar_lea.vmem [#allocation9], 16
        %v363 = vld [vmem:[%s362] sm:$0xff]
        %v364 = vsel %vm321, %v356, 0.0
        %v365 = vadd.f32 %v363, %v364
        %366 = vst.msk [vmem:[%s362] sm:$0xff] %vm342, %v365
        %s367 = smul.u32 %s28, 2
        %s368 = sld [smem:[#allocation2 + %s367]]
        %s369 = sadd.s32 %s367, 1
        %s370 = sld [smem:[#allocation2 + %s369]]
        %s371 = scalar_lea.vmem %s244, 8 [#allocation6]
        %v372 = vld [vmem:[%s371] sm:$0xff]
        %v373 = vxor.u32 %v372, 2147483648
        %v374 = vmul.f32 %v373, 1.442695
        %v375 = vpow.pop %v374
        %v376 = vadd.f32 %v375, 1.0
        %v377 = vrcp.pop %v376
        %v378 = vmul.f32 1.0, %v377
        %s379 = scalar_lea.vmem %s253, 8 [#allocation7]
        %v380 = vld [vmem:[%s379] sm:$0xff]
        %v381 = vsub.f32 %v378, %v380
        %s382 = scalar_lea.vmem %s244, 16 [#allocation6]
        %v383 = vld [vmem:[%s382] sm:$0xff]
        %v384 = vxor.u32 %v383, 2147483648
        %v385 = vmul.f32 %v384, 1.442695
        %v386 = vpow.pop %v385
        %v387 = vadd.f32 %v386, 1.0
        %v388 = vrcp.pop %v387
        %v389 = vmul.f32 1.0, %v388
        %s390 = scalar_lea.vmem %s253, 16 [#allocation7]
        %v391 = vld [vmem:[%s390] sm:$0xff]
        %v392 = vsub.f32 %v389, %v391
        %s393 = scalar_lea.vmem %s244, 24 [#allocation6]
        %v394 = vld [vmem:[%s393] sm:$0xff]
        %s395 = scalar_lea.vmem %s253, 24 [#allocation7]
        %v396 = vld [vmem:[%s395] sm:$0xff]
        %v397 = vstv %s368
        %v398 = vmul.f32 %v396, %v397
        %v399 = vadd.f32 %v398, 1e-06
        %v400 = vlog2.pop %v399
        %v401 = vmul.f32 %v400, 0.6931472
        %v402 = vsub.f32 %v394, %v401
        %s403 = scalar_lea.vmem %s244, 32 [#allocation6]
        %v404 = vld [vmem:[%s403] sm:$0xff]
        %s405 = scalar_lea.vmem %s253, 32 [#allocation7]
        %v406 = vld [vmem:[%s405] sm:$0xff]
        %v407 = vstv %s370
        %v408 = vmul.f32 %v406, %v407
        %v409 = vadd.f32 %v408, 1e-06
        %v410 = vlog2.pop %v409
        %v411 = vmul.f32 %v410, 0.6931472
        %v412 = vsub.f32 %v404, %v411
        %v413 = vmul.f32 %v381, %v381
        %v414 = vmul.f32 %v392, %v392
        %v415 = vadd.f32 %v413, %v414
        %v416 = vmul.f32 %v402, %v402
        %v417 = vadd.f32 %v415, %v416
        %v418 = vmul.f32 %v412, %v412
        %v419 = vadd.f32 %v417, %v418
        %s420 = scalar_lea.vmem [#allocation9], 24
        %v421 = vld [vmem:[%s420] sm:$0xff]
        %v422 = vsel %vm315, %v419, 0.0
        %v423 = vadd.f32 %v421, %v422
        %424 = vst.msk [vmem:[%s420] sm:$0xff] %vm342, %v423
        %s425 = scalar_lea.vmem %s253, 40 [#allocation7]
        %v426 = vld [vmem:[%s425] sm:$0xff]
        %v427 = vcvt.f32.s32.to.zero.pseudo %v426
        %s428 = scalar_lea.vmem %s244, 40 [#allocation6]
        %v429 = vld [vmem:[%s428] sm:$0xff]
        %vm430 = vcmp.eq.s32.totalorder %v427, 0
        %v431 = vsel %vm430, %v429, 0.0
        %s432 = scalar_lea.vmem %s244, 48 [#allocation6]
        %v433 = vld [vmem:[%s432] sm:$0xff]
        %v434 = vmax.f32 %v429, %v433
        %v435 = vsub.f32 %v429, %v434
        %v436 = vmul.f32 %v435, 1.442695
        %v437 = vpow.pop %v436
        %v438 = vsub.f32 %v433, %v434
        %v439 = vmul.f32 %v438, 1.442695
        %v440 = vpow.pop %v439
        %v441 = vadd.f32 %v437, %v440
        %vm442 = vcmp.eq.s32.totalorder %v427, 1
        %v443 = vsel %vm442, %v433, 0.0
        %v444 = vadd.f32 %v431, %v443
        %s445 = scalar_lea.vmem %s244, 56 [#allocation6]
        %v446 = vld [vmem:[%s445] sm:$0xff]
        %v447 = vmax.f32 %v434, %v446
        %v448 = vsub.f32 %v434, %v447
        %v449 = vmul.f32 %v448, 1.442695
        %v450 = vpow.pop %v449
        %v451 = vmul.f32 %v441, %v450
        %v452 = vsub.f32 %v446, %v447
        %v453 = vmul.f32 %v452, 1.442695
        %v454 = vpow.pop %v453
        %v455 = vadd.f32 %v451, %v454
        %vm456 = vcmp.eq.s32.totalorder %v427, 2
        %v457 = vsel %vm456, %v446, 0.0
        %v458 = vadd.f32 %v444, %v457
        %s459 = scalar_lea.vmem %s244, 64 [#allocation6]
        %v460 = vld [vmem:[%s459] sm:$0xff]
        %v461 = vmax.f32 %v447, %v460
        %v462 = vsub.f32 %v447, %v461
        %v463 = vmul.f32 %v462, 1.442695
        %v464 = vpow.pop %v463
        %v465 = vmul.f32 %v455, %v464
        %v466 = vsub.f32 %v460, %v461
        %v467 = vmul.f32 %v466, 1.442695
        %v468 = vpow.pop %v467
        %v469 = vadd.f32 %v465, %v468
        %vm470 = vcmp.eq.s32.totalorder %v427, 3
        %v471 = vsel %vm470, %v460, 0.0
        %v472 = vadd.f32 %v458, %v471
        %v473 = vlog2.pop %v469
        %v474 = vmul.f32 %v473, 0.6931472
        %v475 = vadd.f32 %v461, %v474
        %v476 = vsub.f32 %v475, %v472
        %s477 = scalar_lea.vmem [#allocation9], 32
        %v478 = vld [vmem:[%s477] sm:$0xff]
        %v479 = vsel %vm315, %v476, 0.0
        %v480 = vadd.f32 %v478, %v479
        %481 = vst.msk [vmem:[%s477] sm:$0xff] %vm342, %v480
        %s482 = scalar_lea.vmem [#allocation9], 40
        %v483 = vld [vmem:[%s482] sm:$0xff]
        %v484 = vsel %vm315, 1, 0
        %v485 = vcvt.s32.f32 %v484
        %v486 = vadd.f32 %v483, %v485
        %487 = vst.msk [vmem:[%s482] sm:$0xff] %vm342, %v486
        %s488 = scalar_lea.vmem [#allocation9], 48
        %v489 = vld [vmem:[%s488] sm:$0xff]
        %v490 = vsel %vm317, 1, 0
        %v491 = vcvt.s32.f32 %v490
        %v492 = vadd.f32 %v489, %v491
        %493 = vst.msk [vmem:[%s488] sm:$0xff] %vm342, %v492
        %s494 = scalar_lea.vmem [#allocation9], 56
        %v495 = vld [vmem:[%s494] sm:$0xff]
        %v496 = vsel %vm321, 1, 0
        %v497 = vcvt.s32.f32 %v496
        %v498 = vadd.f32 %v495, %v497
        %499 = vst.msk [vmem:[%s494] sm:$0xff] %vm342, %v498
        // Predicated region
        $region49: #{tpu_custom_call.1} parent=31 // pred_check
          %p500 = pneg %p148
        $region50: #{tpu_custom_call.1} parent=31 // pred_check_branch
          %502 = sbr.rel (%p500) target = $region52
        $region51: #{tpu_custom_call.1} parent=31 // pred_region
          %s503 = smul.u32 8, %s27
          %s505 = ssub.s32 1024, 1024
          %506 = vsyncadd [#allocation4], %s505
          %s507 = smul.addr %s503, 128
          %s508 = scalar_lea.hbm %s3, %s507
          %s509 = sshll.u32 [#allocation9], 4
          %s510 = int_to_ptr.vmem [resolvable:$true] %s509
          %515 = dma.vmem_to_hbm [thread:$0]  %s510, 1024, %s508, [#allocation4], 128, 128, 8
        $region52: #{tpu_custom_call.1} parent=31 // pred_fallthru
          _
        // Predicated region
        $region53: #{tpu_custom_call.1} parent=31 // pred_check
          %p516 = pneg %p148
        $region54: #{tpu_custom_call.1} parent=31 // pred_check_branch
          %518 = sbr.rel (%p516) target = $region56
        $region55: #{tpu_custom_call.1} parent=31 // pred_region
          %519 = dma.done [#allocation4], 1024
        $region56: #{tpu_custom_call.1} parent=31 // pred_fallthru
          _
      $region32: #{tpu_custom_call.1} parent=5 // pred_fallthru
        _
      %p520 = scmp.le.s32.totalorder 2, %s17
      // Predicated region
      $region57: #{tpu_custom_call.1} parent=5 // pred_check
        %p521 = pneg %p520
      $region58: #{tpu_custom_call.1} parent=5 // pred_check_branch
        %523 = sbr.rel (%p521) target = $region60
      $region59: #{tpu_custom_call.1} parent=5 // pred_region
        %s524 = ssub.s32 %s17, 2
      $region60: #{tpu_custom_call.1} parent=5 // pred_fallthru
        _
    $region6: #{tpu_custom_call.1} parent=1 // loop_footer
      %s21 = sadd.s32 1, %s17
    $region7: #{tpu_custom_call.1} parent=1 // loop_footer_branch
      %16 = sbr.rel target = $region3
    $region8: #{tpu_custom_call.1} parent=1 // loop_exit
      _
    %525 = vsyncpa [#allocation3], 1
    %s526 = scalar_lea.sflag [#allocation3], 1
    %527 = vsyncpa %s526, 1
    %528 = vsyncpa [#allocation8], 1
    %s529 = scalar_lea.sflag [#allocation8], 1
    %530 = vsyncpa %s529, 1
    %531 = vsyncpa [#allocation4], 1
    %s532 = scalar_lea.sflag [#allocation4], 1
    %533 = vsyncpa %s532, 1
    %534 = vsyncpa [#allocation5], 1
    %s535 = scalar_lea.sflag [#allocation5], 1
    %536 = vsyncpa %s535, 1

</llo_original>
